<compile_context>
chip_gen: v7x
topology: tpu7x:2x2x1
jax: 0.10.0
libtpu: 0.0.40
codegen_flags: <defaults>
</compile_context>

<pallas_src>
import functools

import jax
import jax.numpy as jnp
from jax.experimental import pallas as pl
from jax.experimental.pallas import tpu as pltpu


def _dice_kernel(scal_ref, x_ref, lab_ref, inter_ref, cnt_ref,
                 inter_acc, cnt_acc, *, hw, ignore_index):
    i = pl.program_id(1)                   # pixel-tile index within the sample
    n_tiles = pl.num_programs(1)

    @pl.when(i == 0)                       # reset per-sample accumulators
    def _():
        inter_acc[...] = jnp.zeros_like(inter_acc)
        cnt_acc[...] = jnp.zeros_like(cnt_acc)

    x = x_ref[...].astype(jnp.float32)     # (C, tile) logits, cast in VMEM
    lab = lab_ref[...].astype(jnp.int32)   # (1, tile) labels, widened in VMEM
    C, tile = x.shape

    # ignore_index remap (PyTorch semantics), driven by SMEM scalars.
    tmin = scal_ref[0]
    do_replace = scal_ref[1]
    lab = jnp.where(jnp.logical_and(do_replace != 0, lab == ignore_index),
                    tmin, lab)

    # Numerically stable softmax pieces over the channel (sublane) axis.
    m = jnp.max(x, axis=0, keepdims=True)            # (1, tile)
    e = jnp.exp(x - m)                               # (C, tile)   -- EUP
    denom = jnp.sum(e, axis=0, keepdims=True)        # (1, tile)
    denom_inv = pl.reciprocal(denom, approx=True)    # (1, tile)   -- EUP

    # Select-based one-hot intersection; softmax / one-hot never materialized.
    c_idx = jax.lax.broadcasted_iota(jnp.int32, (C, tile), 0)
    inter_col = jnp.sum(jnp.where(c_idx == lab, e, 0.0), axis=0,
                        keepdims=True) * denom_inv   # (1, tile)
    in_range = jnp.logical_and(lab >= 0, lab < C)    # (1, tile) == one-hot column sum

    ragged = (hw % tile) != 0   # static: does the last tile need masking?

    if ragged:
        last = i == n_tiles - 1

        @pl.when(last)          # masked accumulation only on the ragged tile
        def _():
            lane = jax.lax.broadcasted_iota(jnp.int32, (1, tile), 1)
            col_valid = lane < (hw - i * tile)
            # select (not multiply) so NaN/Inf from padded garbage are dropped
            inter_acc[...] += jnp.where(col_valid, inter_col, 0.0)
            cnt_acc[...] += jnp.logical_and(col_valid, in_range).astype(jnp.float32)

        @pl.when(jnp.logical_not(last))   # unmasked fast path for full tiles
        def _():
            inter_acc[...] += inter_col
            cnt_acc[...] += in_range.astype(jnp.float32)
    else:
        inter_acc[...] += inter_col
        cnt_acc[...] += in_range.astype(jnp.float32)

    # Per-sample epilogue: one cross-lane reduce, write tiny per-sample partials.
    @pl.when(i == n_tiles - 1)
    def _():
        inter_ref[...] = jnp.reshape(jnp.sum(inter_acc[...]), (1, 1))
        cnt_ref[...] = jnp.reshape(jnp.sum(cnt_acc[...]), (1, 1))


def dice_loss(output, target, smooth=1.0, ignore_index=255,
              target_block_bytes=2 * 1024 * 1024):
    """output: (N, C, H, W) float logits (NCHW, like PyTorch); target: (N, H, W) int labels."""
    N, C, H, W = output.shape
    HW = H * W

    # PyTorch: if ignore_index not in range(target.min(), target.max()) and
    #          (target == ignore_index).sum() > 0: target[target==ignore] = target.min()
    # Only the scalars are computed here; the remap itself happens in-kernel,
    # so no rewritten target array is ever materialized in HBM.
    tmin = jnp.min(target)
    tmax = jnp.max(target)
    not_in_range = jnp.logical_or(ignore_index < tmin, ignore_index >= tmax)
    has_ignore = jnp.any(target == ignore_index)
    do_replace = jnp.logical_and(not_in_range, has_ignore)
    scal = jnp.stack([tmin.astype(jnp.int32), do_replace.astype(jnp.int32)])

    # Pixel tile from a VMEM byte budget for the logits block: multiple of 128
    # lanes, clamped to round_up(HW, 128).  ~2 MiB double-buffered fits v5e's
    # 16 MiB default scoped VMEM and is far past the >=512-lane roofline knee.
    x_item = jnp.dtype(output.dtype).itemsize
    lab_item = jnp.dtype(target.dtype).itemsize
    tile = (int(target_block_bytes) // (C * x_item)) // 128 * 128
    tile = max(tile, 128)
    hw_rounded = ((HW + 127) // 128) * 128
    tile = min(tile, hw_rounded)
    num_tiles = -(-HW // tile)   # ceil-div; ragged last tile masked in-kernel

    # Free, contiguity-preserving reshapes: no transpose, no dtype copy.
    x = output.reshape(N, C, HW)
    lab = target.reshape(N, 1, HW)

    # Explicit scoped-VMEM limit: actual working set (double-buffered blocks +
    # accumulators) with headroom, capped at 40 MiB so it is v7x-safe.
    wset = 2 * C * tile * x_item + 2 * tile * lab_item + 2 * tile * 4 + (1 << 15)
    vmem_limit = int(min(40 << 20, max(16 << 20, 2 * wset)))

    kernel = functools.partial(_dice_kernel, hw=HW, ignore_index=int(ignore_index))
    inter_p, cnt_p = pl.pallas_call(
        kernel,
        out_shape=(jax.ShapeDtypeStruct((N, 1, 1), jnp.float32),
                   jax.ShapeDtypeStruct((N, 1, 1), jnp.float32)),
        grid_spec=pltpu.PrefetchScalarGridSpec(
            num_scalar_prefetch=1,
            grid=(N, num_tiles),
            in_specs=[
                pl.BlockSpec((None, C, tile), lambda n, i, s: (n, 0, i)),
                pl.BlockSpec((None, 1, tile), lambda n, i, s: (n, 0, i)),
            ],
            out_specs=[
                pl.BlockSpec((None, 1, 1), lambda n, i, s: (n, 0, 0)),
                pl.BlockSpec((None, 1, 1), lambda n, i, s: (n, 0, 0)),
            ],
            scratch_shapes=[
                pltpu.VMEM((1, tile), jnp.float32),  # intersection (lane-dense)
                pltpu.VMEM((1, tile), jnp.float32),  # valid one-hot pixel count
            ],
        ),
        compiler_params=pltpu.CompilerParams(
            # Batch axis "parallel": per-sample partial outputs make this safe
            # and let v7x use both TensorCores; pixel axis is the accumulation
            # chain, so it stays "arbitrary".
            dimension_semantics=("parallel", "arbitrary"),
            vmem_limit_bytes=vmem_limit,
        ),
    )(scal, x, lab)

    ti = jnp.sum(inter_p)
    tt = jnp.sum(cnt_p)
    # sum(softmax) == 1.0 per pixel (exactly, in math) -> use N*HW instead of
    # accumulating it (difference vs. the reference is only fp rounding).
    total_softmax = float(N * HW)
    return 1.0 - (2.0 * ti + smooth) / (total_softmax + tt + smooth)


def _ref_dice(output, target, smooth=1.0, ignore_index=255):
    # Pure-JAX reference of the PyTorch forward, for correctness checking.
    target = target.astype(jnp.int32)
    tmin, tmax = jnp.min(target), jnp.max(target)
    not_in_range = jnp.logical_or(ignore_index < tmin, ignore_index >= tmax)
    has_ignore = jnp.sum(target == ignore_index) > 0
    target = jnp.where(
        jnp.logical_and(jnp.logical_and(not_in_range, has_ignore),
                        target == ignore_index),
        tmin, target)
    C = output.shape[1]
    onehot = jax.nn.one_hot(target, C, axis=1, dtype=jnp.float32)
    p = jax.nn.softmax(output.astype(jnp.float32), axis=1)
    inter = jnp.sum(p * onehot)
    return 1.0 - (2.0 * inter + smooth) / (jnp.sum(p) + jnp.sum(onehot) + smooth)


if __name__ == "__main__":
    key = jax.random.PRNGKey(0)
    k1, k2, k3, k4 = jax.random.split(key, 4)

    # Case 1: N=2, C=4, 16x16 — exercises the ignore_index remap path.
    N, C, H, W = 2, 4, 16, 16
    logits = jax.random.normal(k1, (N, C, H, W), dtype=jnp.float32)
    labels = jax.random.randint(k2, (N, H, W), 0, C, dtype=jnp.int32)
    labels = labels.at[0, 0, 0].set(255)
    labels = labels.at[1, 3, 7].set(255)

    loss = dice_loss(logits, labels, smooth=1.0, ignore_index=255)
    jax.block_until_ready(loss)
    ref = _ref_dice(logits, labels, smooth=1.0, ignore_index=255)
    # tolerance covers the approximate (EUP) reciprocal used for the softmax denom
    assert abs(float(loss) - float(ref)) < 2e-3, (float(loss), float(ref))

    # Case 2: ragged pixel count (HW=300) with a forced 128-lane tile, so the
    # masked last-tile path and multi-tile accumulation are exercised.
    N2, C2, H2, W2 = 1, 3, 12, 25
    logits2 = jax.random.normal(k3, (N2, C2, H2, W2), dtype=jnp.float32)
    labels2 = jax.random.randint(k4, (N2, H2, W2), 0, C2, dtype=jnp.int32)

    loss2 = dice_loss(logits2, labels2, smooth=1.0, ignore_index=255,
                      target_block_bytes=C2 * 128 * 4)
    jax.block_until_ready(loss2)
    ref2 = _ref_dice(logits2, labels2, smooth=1.0, ignore_index=255)
    assert abs(float(loss2) - float(ref2)) < 2e-3, (float(loss2), float(ref2))

    print("KERNEL_OK")
</pallas_src>

<mosaic_0001>
module attributes {stable_mosaic.version = 11 : i64} {
  func.func @_dice_kernel(%arg0: i32, %arg1: i32, %arg2: memref<2xi32, #tpu.memory_space<smem>>, %arg3: memref<1x4x256xf32, #tpu.memory_space<vmem>>, %arg4: memref<1x1x256xi32, #tpu.memory_space<vmem>>, %arg5: memref<1x1x1xf32, #tpu.memory_space<vmem>>, %arg6: memref<1x1x1xf32, #tpu.memory_space<vmem>>, %arg7: memref<1x256xf32, #tpu.memory_space<vmem>>, %arg8: memref<1x256xf32, #tpu.memory_space<vmem>>) attributes {dimension_semantics = [#tpu.dimension_semantics<parallel>, #tpu.dimension_semantics<arbitrary>], iteration_bounds = array<i64: 2, 1>, scalar_prefetch = 1 : i64, scratch_operands = 2 : i64, tpu.core_type = #tpu.core_type<tc>, window_params = [{transform_indices = @transform_0, window_bounds = array<i64: 1, 4, 256>}, {transform_indices = @transform_1, window_bounds = array<i64: 1, 1, 256>}, {transform_indices = @transform_2, window_bounds = array<i64: 1, 1, 1>}, {transform_indices = @transform_3, window_bounds = array<i64: 1, 1, 1>}]} {
    %c0_i32 = arith.constant 0 : i32
    %0 = arith.cmpi eq, %arg1, %c0_i32 : i32
    %1 = arith.extui %0 : i1 to i32
    %c0_i32_0 = arith.constant 0 : i32
    %2 = arith.cmpi ne, %1, %c0_i32_0 : i32
    scf.if %2 {
      %cst_22 = arith.constant 0.000000e+00 : f32
      %48 = vector.broadcast %cst_22 : f32 to vector<1x256xf32>
      %c0_23 = arith.constant 0 : index
      %c0_24 = arith.constant 0 : index
      %49 = vector.load %arg7[%c0_23, %c0_24] : memref<1x256xf32, #tpu.memory_space<vmem>>, vector<1x256xf32>
      tpu.vector_store %arg7[%c0_23, %c0_24], %48 {strides = array<i32>} : memref<1x256xf32, #tpu.memory_space<vmem>>, vector<1x256xf32>,
      %cst_25 = arith.constant 0.000000e+00 : f32
      %50 = vector.broadcast %cst_25 : f32 to vector<1x256xf32>
      %c0_26 = arith.constant 0 : index
      %c0_27 = arith.constant 0 : index
      %51 = vector.load %arg8[%c0_26, %c0_27] : memref<1x256xf32, #tpu.memory_space<vmem>>, vector<1x256xf32>
      tpu.vector_store %arg8[%c0_26, %c0_27], %50 {strides = array<i32>} : memref<1x256xf32, #tpu.memory_space<vmem>>, vector<1x256xf32>,
    } else {
    }
    %c0 = arith.constant 0 : index
    %c0_1 = arith.constant 0 : index
    %c0_2 = arith.constant 0 : index
    %3 = vector.load %arg3[%c0, %c0_1, %c0_2] : memref<1x4x256xf32, #tpu.memory_space<vmem>>, vector<1x4x256xf32>
    %4 = vector.shape_cast %3 : vector<1x4x256xf32> to vector<4x256xf32>
    %c0_3 = arith.constant 0 : index
    %c0_4 = arith.constant 0 : index
    %c0_5 = arith.constant 0 : index
    %5 = vector.load %arg4[%c0_3, %c0_4, %c0_5] : memref<1x1x256xi32, #tpu.memory_space<vmem>>, vector<1x1x256xi32>
    %6 = vector.shape_cast %5 : vector<1x1x256xi32> to vector<1x256xi32>
    %c0_6 = arith.constant 0 : index
    %7 = memref.load %arg2[%c0_6] : memref<2xi32, #tpu.memory_space<smem>>
    %c1 = arith.constant 1 : index
    %8 = memref.load %arg2[%c1] : memref<2xi32, #tpu.memory_space<smem>>
    %c0_i32_7 = arith.constant 0 : i32
    %9 = arith.cmpi ne, %8, %c0_i32_7 : i32
    %c255_i32 = arith.constant 255 : i32
    %10 = vector.broadcast %c255_i32 : i32 to vector<1x256xi32>
    %11 = arith.cmpi eq, %6, %10 : vector<1x256xi32>
    %12 = vector.broadcast %9 : i1 to vector<1x256xi1>
    %13 = arith.andi %12, %11 : vector<1x256xi1>
    %14 = vector.broadcast %7 : i32 to vector<1x256xi32>
    %15 = arith.select %13, %14, %6 : vector<1x256xi1>, vector<1x256xi32>
    %cst = arith.constant dense<0xFF800000> : vector<256xf32>
    %16 = vector.multi_reduction <maximumf>, %4, %cst [0] : vector<4x256xf32> to vector<256xf32>
    %17 = vector.shape_cast %16 : vector<256xf32> to vector<1x256xf32>
    %18 = vector.broadcast %17 : vector<1x256xf32> to vector<4x256xf32>
    %19 = arith.subf %4, %18 : vector<4x256xf32>
    %20 = math.exp %19 : vector<4x256xf32>
    %cst_8 = arith.constant dense<0.000000e+00> : vector<256xf32>
    %21 = vector.multi_reduction <add>, %20, %cst_8 [0] : vector<4x256xf32> to vector<256xf32>
    %22 = vector.shape_cast %21 : vector<256xf32> to vector<1x256xf32>
    %23 = tpu.reciprocal %22 {approx = true} : vector<1x256xf32> -> vector<1x256xf32>
    %24 = tpu.iota {dimensions = array<i32: 0>} : vector<4x256xi32>
    %25 = vector.broadcast %15 : vector<1x256xi32> to vector<4x256xi32>
    %26 = arith.cmpi eq, %24, %25 : vector<4x256xi32>
    %cst_9 = arith.constant 0.000000e+00 : f32
    %27 = vector.broadcast %cst_9 : f32 to vector<4x256xf32>
    %28 = arith.select %26, %20, %27 : vector<4x256xi1>, vector<4x256xf32>
    %cst_10 = arith.constant dense<0.000000e+00> : vector<256xf32>
    %29 = vector.multi_reduction <add>, %28, %cst_10 [0] : vector<4x256xf32> to vector<256xf32>
    %30 = vector.shape_cast %29 : vector<256xf32> to vector<1x256xf32>
    %31 = arith.mulf %30, %23 : vector<1x256xf32>
    %c0_i32_11 = arith.constant 0 : i32
    %32 = vector.broadcast %c0_i32_11 : i32 to vector<1x256xi32>
    %33 = arith.cmpi sge, %15, %32 : vector<1x256xi32>
    %c4_i32 = arith.constant 4 : i32
    %34 = vector.broadcast %c4_i32 : i32 to vector<1x256xi32>
    %35 = arith.cmpi slt, %15, %34 : vector<1x256xi32>
    %36 = arith.andi %33, %35 : vector<1x256xi1>
    %c0_12 = arith.constant 0 : index
    %c0_13 = arith.constant 0 : index
    %37 = vector.load %arg7[%c0_12, %c0_13] : memref<1x256xf32, #tpu.memory_space<vmem>>, vector<1x256xf32>
    %38 = arith.addf %37, %31 : vector<1x256xf32>
    %c0_14 = arith.constant 0 : index
    %c0_15 = arith.constant 0 : index
    %39 = vector.load %arg7[%c0_14, %c0_15] : memref<1x256xf32, #tpu.memory_space<vmem>>, vector<1x256xf32>
    tpu.vector_store %arg7[%c0_14, %c0_15], %38 {strides = array<i32>} : memref<1x256xf32, #tpu.memory_space<vmem>>, vector<1x256xf32>,
    %c0_16 = arith.constant 0 : index
    %c0_17 = arith.constant 0 : index
    %40 = vector.load %arg8[%c0_16, %c0_17] : memref<1x256xf32, #tpu.memory_space<vmem>>, vector<1x256xf32>
    %41 = arith.extui %36 : vector<1x256xi1> to vector<1x256xi32>
    %42 = arith.sitofp %41 : vector<1x256xi32> to vector<1x256xf32>
    %43 = arith.addf %40, %42 : vector<1x256xf32>
    %c0_18 = arith.constant 0 : index
    %c0_19 = arith.constant 0 : index
    %44 = vector.load %arg8[%c0_18, %c0_19] : memref<1x256xf32, #tpu.memory_space<vmem>>, vector<1x256xf32>
    tpu.vector_store %arg8[%c0_18, %c0_19], %43 {strides = array<i32>} : memref<1x256xf32, #tpu.memory_space<vmem>>, vector<1x256xf32>,
    %c0_i32_20 = arith.constant 0 : i32
    %45 = arith.cmpi eq, %arg1, %c0_i32_20 : i32
    %46 = arith.extui %45 : i1 to i32
    %c0_i32_21 = arith.constant 0 : i32
    %47 = arith.cmpi ne, %46, %c0_i32_21 : i32
    scf.if %47 {
      %c0_22 = arith.constant 0 : index
      %c0_23 = arith.constant 0 : index
      %48 = vector.load %arg7[%c0_22, %c0_23] : memref<1x256xf32, #tpu.memory_space<vmem>>, vector<1x256xf32>
      %49 = vector.shape_cast %48 : vector<1x256xf32> to vector<1x1x256xf32>
      %cst_24 = arith.constant dense<0.000000e+00> : vector<1xf32>
      %50 = vector.multi_reduction <add>, %49, %cst_24 [1, 2] : vector<1x1x256xf32> to vector<1xf32>
      %51 = vector.shape_cast %50 : vector<1xf32> to vector<1x1x1xf32>
      %52 = vector.extract %51[0, 0, 0] : f32 from vector<1x1x1xf32>
      %53 = vector.broadcast %52 : f32 to vector<1x1xf32>
      %c0_25 = arith.constant 0 : index
      %c0_26 = arith.constant 0 : index
      %c0_27 = arith.constant 0 : index
      %54 = vector.load %arg5[%c0_25, %c0_26, %c0_27] : memref<1x1x1xf32, #tpu.memory_space<vmem>>, vector<1x1x1xf32>
      %55 = vector.shape_cast %54 : vector<1x1x1xf32> to vector<1x1xf32>
      %56 = vector.shape_cast %53 : vector<1x1xf32> to vector<1x1x1xf32>
      tpu.vector_store %arg5[%c0_25, %c0_26, %c0_27], %56 {strides = array<i32>} : memref<1x1x1xf32, #tpu.memory_space<vmem>>, vector<1x1x1xf32>,
      %c0_28 = arith.constant 0 : index
      %c0_29 = arith.constant 0 : index
      %57 = vector.load %arg8[%c0_28, %c0_29] : memref<1x256xf32, #tpu.memory_space<vmem>>, vector<1x256xf32>
      %58 = vector.shape_cast %57 : vector<1x256xf32> to vector<1x1x256xf32>
      %cst_30 = arith.constant dense<0.000000e+00> : vector<1xf32>
      %59 = vector.multi_reduction <add>, %58, %cst_30 [1, 2] : vector<1x1x256xf32> to vector<1xf32>
      %60 = vector.shape_cast %59 : vector<1xf32> to vector<1x1x1xf32>
      %61 = vector.extract %60[0, 0, 0] : f32 from vector<1x1x1xf32>
      %62 = vector.broadcast %61 : f32 to vector<1x1xf32>
      %c0_31 = arith.constant 0 : index
      %c0_32 = arith.constant 0 : index
      %c0_33 = arith.constant 0 : index
      %63 = vector.load %arg6[%c0_31, %c0_32, %c0_33] : memref<1x1x1xf32, #tpu.memory_space<vmem>>, vector<1x1x1xf32>
      %64 = vector.shape_cast %63 : vector<1x1x1xf32> to vector<1x1xf32>
      %65 = vector.shape_cast %62 : vector<1x1xf32> to vector<1x1x1xf32>
      tpu.vector_store %arg6[%c0_31, %c0_32, %c0_33], %65 {strides = array<i32>} : memref<1x1x1xf32, #tpu.memory_space<vmem>>, vector<1x1x1xf32>,
    } else {
    }
    return
  }
  func.func @transform_0(%arg0: i32, %arg1: i32, %arg2: memref<2xi32, #tpu.memory_space<smem>>) -> (i32, i32, i32) {
    %c0_i32 = arith.constant 0 : i32
    %c0_i32_0 = arith.constant 0 : i32
    return %arg0, %c0_i32, %arg1 : i32, i32, i32
  }
  func.func @transform_1(%arg0: i32, %arg1: i32, %arg2: memref<2xi32, #tpu.memory_space<smem>>) -> (i32, i32, i32) {
    %c0_i32 = arith.constant 0 : i32
    %c0_i32_0 = arith.constant 0 : i32
    return %arg0, %c0_i32, %arg1 : i32, i32, i32
  }
  func.func @transform_2(%arg0: i32, %arg1: i32, %arg2: memref<2xi32, #tpu.memory_space<smem>>) -> (i32, i32, i32) {
    %c0_i32 = arith.constant 0 : i32
    %c0_i32_0 = arith.constant 0 : i32
    %c0_i32_1 = arith.constant 0 : i32
    return %arg0, %c0_i32, %c0_i32_0 : i32, i32, i32
  }
  func.func @transform_3(%arg0: i32, %arg1: i32, %arg2: memref<2xi32, #tpu.memory_space<smem>>) -> (i32, i32, i32) {
    %c0_i32 = arith.constant 0 : i32
    %c0_i32_0 = arith.constant 0 : i32
    %c0_i32_1 = arith.constant 0 : i32
    return %arg0, %c0_i32, %c0_i32_0 : i32, i32, i32
  }
}

</mosaic_0001>

<llo_original>
// kernel: tpu_custom_call.1
$region0: #{tpu_custom_call.1}
  #allocation0 [shape = 'u32[]', space=smem, size = 0x4, offset = 0x4, fixed_abs, tag = 'smem constant byte address 0x4 - core index']
  #allocation1 [shape = 'u32[144,128]{1,0:T(1,128)}', space=vmem, size = 0x12000, scoped, tag = 'internal scratch']
  #allocation2 [shape = 'f32[1,256]{1,0:T(1,128)}', space=vmem, size = 0x400, scoped, tag = 'scratch operand']
  #allocation3 [shape = 'f32[1,256]{1,0:T(1,128)}', space=vmem, size = 0x400, scoped, tag = 'scratch operand']
  #allocation4 [shape = 's32[1]{0}', space=sflag, size = 0x4, scoped, tag = 'scoped memory for tpu_custom_call.1']
  #allocation5 [shape = 'u8[512]{0}', space=smem, size = 0x200, scoped, tag = 'prefetched SMEM operand 0']
  %s0 = inlined_call_operand.hbm [shape: s32[2], index: 0, kind: input, shape index: {}]
  %s1 = inlined_call_operand.hbm [shape: f32[2,4,256], index: 1, kind: input, shape index: {}]
  %s2 = inlined_call_operand.vmem [shape: s32[2,1,256], index: 2, kind: input, shape index: {}]
  %s3 = inlined_call_operand.vmem [shape: f32[2,1,1], index: 3, kind: output, shape index: {0}]
  %s4 = inlined_call_operand.vmem [shape: f32[2,1,1], index: 4, kind: output, shape index: {1}]
  %5 = xla_tuple %s3, %s4
  %s6 = sld [smem:[#allocation0]]
  $region61: #{tpu_custom_call.1} parent=0
    _
  %s8 = ssub.s32 1, %s6
  %s9 = scalar_select 0, %s8, %s6
  %11 = dma.hbm_to_smem %s0, 16, [#allocation5], [#allocation4]
  %12 = dma.done [#allocation4], 16
  %13 = sfence
  $region1: #{tpu_custom_call.1} parent=0
    #allocation6 [shape = 'u8[8192]{0}', space=vmem, size = 0x2000, scoped, tag = 'input window, operand 1']
    #allocation7 [shape = 's32[2]{0}', space=sflag, size = 0x8, scoped, tag = 'scoped memory for tpu_custom_call.1']
    %14 = vsyncpa [#allocation7], 0
    %s15 = scalar_lea.sflag [#allocation7], 1
    %16 = vsyncpa %s15, 0
    loop: start=0, step=1, limit=4
    $region2: #{tpu_custom_call.1} parent=1 // loop_pre_header
      _
    $region3: #{tpu_custom_call.1} parent=1 // loop_header
      %s18 = sphi 0, %s22
      %p19 = scmp.ge.s32.totalorder %s18, 4
      %s25 = sphi 0, %s37
      %s26 = sphi 0, %s33
      %s27 = sphi 0, %s25
      %s28 = sphi 0, %s26
      %s29 = sphi 0, %s27
      %s30 = sphi 0, %s28
      %s42 = sphi 0, %s44
      %s45 = sphi 0, %s42
      %s46 = sphi 0, %s45
      %s62 = sphi 0, %s46
      %s70 = sphi 0, %s72
      %s73 = sphi 0, %s70
      %s74 = sphi 0, %s73
      %s90 = sphi 0, %s74
      %s96 = sphi 0, %s98
      %s99 = sphi 0, %s96
      %s100 = sphi 0, %s99
      %s116 = sphi 0, %s100
      %s122 = sphi 0, %s124
      %s125 = sphi 0, %s122
      %s126 = sphi 0, %s125
      %s142 = sphi 0, %s126
    $region4: #{tpu_custom_call.1} parent=1 // loop_header_branch
      %21 = sbr.rel (%p19) target = $region8
    $region5: #{tpu_custom_call.1} parent=1 // loop_body
      %s23 = ssub.s32 %s18, 1
      %s24 = ssub.s32 %s18, 2
      %s31 = sadd.s32 1, %s26
      %p32 = scmp.ge.s32.totalorder %s31, 1
      %s33 = scalar_select %p32, 0, %s31
      %s34 = sadd.s32 1, %s25
      %s35 = scalar_select %p32, %s34, %s25
      %p36 = scmp.ge.s32.totalorder %s35, 2
      %s37 = scalar_select %p36, 0, %s35
      %s38 = ssub.s32 %s25, %s37
      %s39 = ssub.s32 %s26, %s33
      %s40 = sor.u32 %s38, %s39
      %p41 = scmp.eq.s32.totalorder %s40, 0
      %s43 = sadd.s32 %s42, 1
      %s44 = scalar_select %p41, %s42, %s43
      %p47 = pneg %p41
      %p48 = scmp.eq.s32.totalorder %s18, 1
      %p49 = por %p47, %p48
      %p50 = scmp.ne.s32.totalorder %s42, %s45
      %p51 = scmp.eq.s32.totalorder %s18, 0
      %p52 = por %p50, %p51
      %p53 = scmp.ne.s32.totalorder %s42, %s45
      %p54 = scmp.eq.s32.totalorder %s23, 1
      %p55 = por %p53, %p54
      %p56 = scmp.ne.s32.totalorder %s45, %s46
      %p57 = scmp.eq.s32.totalorder %s23, 0
      %p58 = por %p56, %p57
      %p59 = scmp.ne.s32.totalorder %s45, %s46
      %p60 = scmp.eq.s32.totalorder %s24, 1
      %p61 = por %p59, %p60
      %p63 = scmp.ne.s32.totalorder %s46, %s62
      %p64 = scmp.eq.s32.totalorder %s24, 0
      %p65 = por %p63, %p64
      %s66 = ssub.s32 %s25, %s37
      %s67 = ssub.s32 %s26, %s33
      %s68 = sor.u32 %s66, %s67
      %p69 = scmp.eq.s32.totalorder %s68, 0
      %s71 = sadd.s32 %s70, 1
      %s72 = scalar_select %p69, %s70, %s71
      %p75 = pneg %p69
      %p76 = scmp.eq.s32.totalorder %s18, 1
      %p77 = por %p75, %p76
      %p78 = scmp.ne.s32.totalorder %s70, %s73
      %p79 = scmp.eq.s32.totalorder %s18, 0
      %p80 = por %p78, %p79
      %p81 = scmp.ne.s32.totalorder %s70, %s73
      %p82 = scmp.eq.s32.totalorder %s23, 1
      %p83 = por %p81, %p82
      %p84 = scmp.ne.s32.totalorder %s73, %s74
      %p85 = scmp.eq.s32.totalorder %s23, 0
      %p86 = por %p84, %p85
      %p87 = scmp.ne.s32.totalorder %s73, %s74
      %p88 = scmp.eq.s32.totalorder %s24, 1
      %p89 = por %p87, %p88
      %p91 = scmp.ne.s32.totalorder %s74, %s90
      %p92 = scmp.eq.s32.totalorder %s24, 0
      %p93 = por %p91, %p92
      %s94 = ssub.s32 %s25, %s37
      %p95 = scmp.eq.s32.totalorder %s94, 0
      %s97 = sadd.s32 %s96, 1
      %s98 = scalar_select %p95, %s96, %s97
      %p101 = pneg %p95
      %p102 = scmp.eq.s32.totalorder %s18, 1
      %p103 = por %p101, %p102
      %p104 = scmp.ne.s32.totalorder %s96, %s99
      %p105 = scmp.eq.s32.totalorder %s18, 0
      %p106 = por %p104, %p105
      %p107 = scmp.ne.s32.totalorder %s96, %s99
      %p108 = scmp.eq.s32.totalorder %s23, 1
      %p109 = por %p107, %p108
      %p110 = scmp.ne.s32.totalorder %s99, %s100
      %p111 = scmp.eq.s32.totalorder %s23, 0
      %p112 = por %p110, %p111
      %p113 = scmp.ne.s32.totalorder %s99, %s100
      %p114 = scmp.eq.s32.totalorder %s24, 1
      %p115 = por %p113, %p114
      %p117 = scmp.ne.s32.totalorder %s100, %s116
      %p118 = scmp.eq.s32.totalorder %s24, 0
      %p119 = por %p117, %p118
      %s120 = ssub.s32 %s25, %s37
      %p121 = scmp.eq.s32.totalorder %s120, 0
      %s123 = sadd.s32 %s122, 1
      %s124 = scalar_select %p121, %s122, %s123
      %p127 = pneg %p121
      %p128 = scmp.eq.s32.totalorder %s18, 1
      %p129 = por %p127, %p128
      %p130 = scmp.ne.s32.totalorder %s122, %s125
      %p131 = scmp.eq.s32.totalorder %s18, 0
      %p132 = por %p130, %p131
      %p133 = scmp.ne.s32.totalorder %s122, %s125
      %p134 = scmp.eq.s32.totalorder %s23, 1
      %p135 = por %p133, %p134
      %p136 = scmp.ne.s32.totalorder %s125, %s126
      %p137 = scmp.eq.s32.totalorder %s23, 0
      %p138 = por %p136, %p137
      %p139 = scmp.ne.s32.totalorder %s125, %s126
      %p140 = scmp.eq.s32.totalorder %s24, 1
      %p141 = por %p139, %p140
      %p143 = scmp.ne.s32.totalorder %s126, %s142
      %p144 = scmp.eq.s32.totalorder %s24, 0
      %p145 = por %p143, %p144
      %p146 = scmp.le.s32.totalorder 1, %s18
      %p147 = scmp.lt.s32.totalorder %s18, 3
      %p148 = pnand %p146, %p147
      %p149 = pneg %p148
      // Predicated region
      $region9: #{tpu_custom_call.1} parent=5 // pred_check
        _
      $region10: #{tpu_custom_call.1} parent=5 // pred_check_branch
        %151 = sbr.rel (%p148) target = $region12
      $region11: #{tpu_custom_call.1} parent=5 // pred_region
        %s152 = ssub.s32 %s18, 1
      $region12: #{tpu_custom_call.1} parent=5 // pred_fallthru
        _
      %p153 = scmp.lt.s32.totalorder %s18, 2
      // Predicated region
      $region13: #{tpu_custom_call.1} parent=5 // pred_check
        %p154 = pneg %p153
      $region14: #{tpu_custom_call.1} parent=5 // pred_check_branch
        %156 = sbr.rel (%p154) target = $region16
      $region15: #{tpu_custom_call.1} parent=5 // pred_region
        // Predicated region
        $region17: #{tpu_custom_call.1} parent=15 // pred_check
          %p157 = pneg %p52
        $region18: #{tpu_custom_call.1} parent=15 // pred_check_branch
          %159 = sbr.rel (%p157) target = $region20
        $region19: #{tpu_custom_call.1} parent=15 // pred_region
          %s160 = sand.u32 %s42, 1
          %s161 = scalar_lea.sflag [#allocation7], %s160
          %s162 = sand.u32 %s42, 1
          %s163 = smul.addr %s162, 8
          %s164 = scalar_lea.vmem [#allocation6], %s163
          %s165 = smul.u32 2, %s26
          %s167 = ssub.s32 128, 128
          %168 = vsyncadd %s161, %s167
          %s169 = smul.addr %s25, 2
          %s170 = sadd.s32 %s165, %s169
          %s171 = smul.addr %s170, 64
          %s172 = scalar_lea.hbm %s1, %s171
          %s174 = sshll.u32 %s164, 4
          %s175 = int_to_ptr.vmem [resolvable:$true] %s174
          %177 = dma.hbm_to_vmem [thread:$0]  %s172, 128, %s175, %s161
        $region20: #{tpu_custom_call.1} parent=15 // pred_fallthru
          _
        // Predicated region
        $region21: #{tpu_custom_call.1} parent=15 // pred_check
          %p178 = pneg %p80
        $region22: #{tpu_custom_call.1} parent=15 // pred_check_branch
          %180 = sbr.rel (%p178) target = $region24
        $region23: #{tpu_custom_call.1} parent=15 // pred_region
          %s181 = smul.u32 2, %s26
          %p182 = scmp.lt.s32.totalorder %s25, 1
          %s183 = scalar_select %p182, %s25, 1
          %p184 = scmp.lt.s32.totalorder %s181, 1
          %s185 = scalar_select %p184, %s181, 1
          %s186 = smul.addr %s183, 2
          %s187 = sadd.s32 %s185, %s186
          %s188 = scalar_lea.vmem %s2, %s187
          %s189 = smul.u32 2, %s26
        $region24: #{tpu_custom_call.1} parent=15 // pred_fallthru
          _
      $region16: #{tpu_custom_call.1} parent=5 // pred_fallthru
        _
      %p190 = scmp.le.s32.totalorder 1, %s18
      %p191 = scmp.lt.s32.totalorder %s18, 3
      %p192 = pnand %p190, %p191
      %p193 = pneg %p192
      // Predicated region
      $region25: #{tpu_custom_call.1} parent=5 // pred_check
        _
      $region26: #{tpu_custom_call.1} parent=5 // pred_check_branch
        %195 = sbr.rel (%p192) target = $region28
      $region27: #{tpu_custom_call.1} parent=5 // pred_region
        %s196 = ssub.s32 %s18, 1
        %s197 = sand.u32 %s45, 1
        %s198 = scalar_lea.sflag [#allocation7], %s197
        %s199 = sand.u32 %s45, 1
        %s200 = smul.addr %s199, 8
        %s201 = scalar_lea.vmem [#allocation6], %s200
        // Predicated region
        $region29: #{tpu_custom_call.1} parent=27 // pred_check
          %p202 = pneg %p58
        $region30: #{tpu_custom_call.1} parent=27 // pred_check_branch
          %204 = sbr.rel (%p202) target = $region32
        $region31: #{tpu_custom_call.1} parent=27 // pred_region
          %205 = dma.done %s198, 128
        $region32: #{tpu_custom_call.1} parent=27 // pred_fallthru
          _
        %s206 = sand.u32 %s45, 1
        %s207 = scalar_lea.sflag [#allocation7], %s206
        %s208 = sand.u32 %s45, 1
        %s209 = smul.addr %s208, 8
        %s210 = scalar_lea.vmem [#allocation6], %s209
        %p211 = pneg %p58
        %p212 = pneg %p55
        %s213 = smul.u32 2, %s28
        %p214 = scmp.lt.s32.totalorder %s27, 1
        %s215 = scalar_select %p214, %s27, 1
        %p216 = scmp.lt.s32.totalorder %s213, 1
        %s217 = scalar_select %p216, %s213, 1
        %s218 = smul.addr %s215, 2
        %s219 = sadd.s32 %s217, %s218
        %s220 = scalar_lea.vmem %s2, %s219
        %p221 = pneg %p86
        %p222 = pneg %p83
        %p223 = pneg %p112
        %p224 = pneg %p109
        %p225 = scmp.lt.s32.totalorder %s27, 1
        %s226 = scalar_select %p225, %s27, 1
        %s227 = scalar_lea.vmem %s3, %s226
        %p228 = pneg %p138
        %p229 = pneg %p135
        %p230 = scmp.lt.s32.totalorder %s27, 1
        %s231 = scalar_select %p230, %s27, 1
        %s232 = scalar_lea.vmem %s4, %s231
        %s233 = smul.u32 2, %s28
        %s234 = smul.u32 2, %s28
        %p235 = scmp.lt.s32.totalorder %s27, 1
        %s236 = scalar_select %p235, %s27, 1
        %p237 = scmp.lt.s32.totalorder %s234, 1
        %s238 = scalar_select %p237, %s234, 1
        %s239 = smul.addr %s236, 2
        %s240 = sadd.s32 %s238, %s239
        %s241 = scalar_lea.vmem %s2, %s240
        %s242 = smul.u32 2, %s28
        %p243 = scmp.lt.s32.totalorder %s27, 1
        %s244 = scalar_select %p243, %s27, 1
        %s245 = scalar_lea.vmem %s3, %s244
        %p246 = scmp.lt.s32.totalorder %s27, 1
        %s247 = scalar_select %p246, %s27, 1
        %s248 = scalar_lea.vmem %s4, %s247
        %p249 = scmp.eq.s32.totalorder %s28, 0
        // Predicated region
        $region33: #{tpu_custom_call.1} parent=27 // pred_check
          %p250 = pneg %p249
        $region34: #{tpu_custom_call.1} parent=27 // pred_check_branch
          %252 = sbr.rel (%p250) target = $region36
        $region35: #{tpu_custom_call.1} parent=27 // pred_region
          %v253 = vlaneseq
          %vm254 = vcmp.ge.s32.totalorder %v253, 0
          %vm255 = vcmp.lt.s32.totalorder %v253, 256
          %vm256 = vmand %vm254, %vm255
          %257 = vst.msk [vmem:[#allocation2] sm:$0x3] %vm256, 0.0
          %258 = vst.msk [vmem:[#allocation3] sm:$0x3] %vm256, 0.0
        $region36: #{tpu_custom_call.1} parent=27 // pred_fallthru
          _
        %v259 = vld [vmem:[%s201] sm:$0xff]
        %v260 = vld [vmem:[%s241] sm:$0x3]
        %s261 = sld [smem:[#allocation5]]
        %s262 = sld [smem:[#allocation5 + $0x1]]
        %p263 = scmp.ne.s32.totalorder %s262, 0
        %vm264 = vcmp.eq.s32.totalorder %v260, 255
        %s265 = scalar_select %p263, 1, 0
        %v266 = vstv %s265
        %vm267 = vcmp.eq.s32.totalorder %v266, 1
        %vm268 = vmand %vm267, %vm264
        %v269 = vstv %s261
        %v270 = vsel %vm268, %v269, %v260
        %v272 = vcombine.high %v259, %v259
        %vm274 = vcmask 1043456
        %v275 = vsel %vm274, %v259, -inf
        %v276 = vrot.slane %v275, 4
        %v277 = vmax.f32 %v275, %v276
        %v278 = vrot.slane %v277, 2
        %v279 = vmax.f32 %v277, %v278
        %v280 = vrot.slane %v279, 1
        %v281 = vmax.f32 %v279, %v280
        %v282 = vsel %vm274, %v272, -inf
        %v283 = vrot.slane %v282, 4
        %v284 = vmax.f32 %v282, %v283
        %v285 = vrot.slane %v284, 2
        %v286 = vmax.f32 %v284, %v285
        %v287 = vrot.slane %v286, 1
        %v288 = vmax.f32 %v286, %v287
        %v291 = vcombine.low %v281, %v288
        %v293 = vsub.f32 %v259, %v291
        %v294 = vmul.f32 %v293, 1.442695
        %v295 = vpow.pop %v294
        %v297 = vcombine.high %v295, %v295
        %v299 = vsel %vm274, %v295, 0.0
        %v300 = vrot.slane %v299, 4
        %v301 = vadd.f32 %v299, %v300
        %v302 = vrot.slane %v301, 2
        %v303 = vadd.f32 %v301, %v302
        %v304 = vrot.slane %v303, 1
        %v305 = vadd.f32 %v303, %v304
        %v306 = vsel %vm274, %v297, 0.0
        %v307 = vrot.slane %v306, 4
        %v308 = vadd.f32 %v306, %v307
        %v309 = vrot.slane %v308, 2
        %v310 = vadd.f32 %v308, %v309
        %v311 = vrot.slane %v310, 1
        %v312 = vadd.f32 %v310, %v311
        %v313 = vrcp.pop %v305
        %v314 = vrcp.pop %v312
        %v315 = vlaneseq
        %v316 = vshrl.u32 %v315, 7
        %v317 = vlaneseq
        %v318 = vshrl.u32 %v317, 7
        %v319 = vsub.s32 0, %v318
        %v320 = vrot.slane %v270, %v319
        %v321 = vlaneseq
        %v322 = vshrl.u32 %v321, 7
        %v323 = vsub.s32 1, %v322
        %v324 = vrot.slane %v270, %v323
        %vm325 = vcmp.eq.s32.totalorder %v316, %v320
        %vm326 = vcmp.eq.s32.totalorder %v316, %v324
        %v327 = vsel %vm325, %v295, 0.0
        %v328 = vsel %vm326, %v297, 0.0
        %v329 = vsel %vm274, %v327, 0.0
        %v330 = vrot.slane %v329, 4
        %v331 = vadd.f32 %v329, %v330
        %v332 = vrot.slane %v331, 2
        %v333 = vadd.f32 %v331, %v332
        %v334 = vrot.slane %v333, 1
        %v335 = vadd.f32 %v333, %v334
        %v336 = vsel %vm274, %v328, 0.0
        %v337 = vrot.slane %v336, 4
        %v338 = vadd.f32 %v336, %v337
        %v339 = vrot.slane %v338, 2
        %v340 = vadd.f32 %v338, %v339
        %v341 = vrot.slane %v340, 1
        %v342 = vadd.f32 %v340, %v341
        %v343 = vmul.f32 %v335, %v313
        %v344 = vmul.f32 %v342, %v314
        %vm345 = vcmp.ge.s32.totalorder %v270, 0
        %vm346 = vcmp.lt.s32.totalorder %v270, 4
        %vm347 = vmand %vm345, %vm346
        %v348 = vld [vmem:[#allocation2] sm:$0x3]
        %v351 = vcombine.low %v343, %v344
        %v353 = vunpack.c.l.s4 1966171168
        %v354 = vunpack.c.0.s8 %v353
        %v355 = vlaneseq
        %v356 = vshrl.u32 %v355, 7
        %v357 = vsub.s32 %v354, %v356
        %v358 = vrot.slane %v351, %v357
        %v360 = vunpack.c.l.s4 1966171168
        %v361 = vunpack.c.0.s8 %v360
        %v362 = vlaneseq
        %v363 = vshrl.u32 %v362, 7
        %v364 = vsub.s32 %v361, %v363
        %v365 = vrot.slane %v358, %v364
        %v367 = vadd.f32 %v348, %v365
        %v368 = vlaneseq
        %vm369 = vcmp.ge.s32.totalorder %v368, 0
        %vm370 = vcmp.lt.s32.totalorder %v368, 256
        %vm371 = vmand %vm369, %vm370
        %372 = vst.msk [vmem:[#allocation2] sm:$0x3] %vm371, %v367
        %v373 = vld [vmem:[#allocation3] sm:$0x3]
        %v374 = vsel %vm347, 1, 0
        %v375 = vcvt.s32.f32 %v374
        %v376 = vadd.f32 %v373, %v375
        %377 = vst.msk [vmem:[#allocation3] sm:$0x3] %vm371, %v376
        // Predicated region
        $region37: #{tpu_custom_call.1} parent=27 // pred_check
          %p378 = pneg %p249
        $region38: #{tpu_custom_call.1} parent=27 // pred_check_branch
          %380 = sbr.rel (%p378) target = $region40
        $region39: #{tpu_custom_call.1} parent=27 // pred_region
          %v381 = vld [vmem:[#allocation2] sm:$0x3]
          %v383 = vlaneseq
          %v384 = vshrl.u32 %v383, 7
          %v385 = vsub.s32 0, %v384
          %v386 = vrot.slane %v381, %v385
          %v387 = vlaneseq
          %v388 = vshrl.u32 %v387, 7
          %v389 = vsub.s32 1, %v388
          %v390 = vrot.slane %v381, %v389
          %vm393 = vcmask 1040384
          %v394 = vsel %vm393, %v386, 0.0
          %v395 = vsel %vm393, %v390, 0.0
          %v396 = vadd.f32 %v394, %v395
          %397 = vadd.xlane.f32.xlu0 %v396
          %v398 = vpop.xlane.xlu0 %397
          %v399 = vrot.slane %v398, 4
          %v400 = vadd.f32 %v398, %v399
          %v401 = vrot.slane %v400, 2
          %v402 = vadd.f32 %v400, %v401
          %v403 = vrot.slane %v402, 1
          %v404 = vadd.f32 %v402, %v403
          %s405 = vtos %v404
          %v406 = vstv %s405
          %vm407 = vcmask 0
          %408 = vst.msk [vmem:[%s245] sm:$0x1] %vm407, %v406
          %v409 = vld [vmem:[#allocation3] sm:$0x3]
          %v411 = vlaneseq
          %v412 = vshrl.u32 %v411, 7
          %v413 = vsub.s32 0, %v412
          %v414 = vrot.slane %v409, %v413
          %v415 = vlaneseq
          %v416 = vshrl.u32 %v415, 7
          %v417 = vsub.s32 1, %v416
          %v418 = vrot.slane %v409, %v417
          %v421 = vsel %vm393, %v414, 0.0
          %v422 = vsel %vm393, %v418, 0.0
          %v423 = vadd.f32 %v421, %v422
          %424 = vadd.xlane.f32.xlu0 %v423
          %v425 = vpop.xlane.xlu0 %424
          %v426 = vrot.slane %v425, 4
          %v427 = vadd.f32 %v425, %v426
          %v428 = vrot.slane %v427, 2
          %v429 = vadd.f32 %v427, %v428
          %v430 = vrot.slane %v429, 1
          %v431 = vadd.f32 %v429, %v430
          %s432 = vtos %v431
          %v433 = vstv %s432
          %434 = vst.msk [vmem:[%s248] sm:$0x1] %vm407, %v433
        $region40: #{tpu_custom_call.1} parent=27 // pred_fallthru
          _
        %p435 = scmp.lt.s32.totalorder %s27, 1
        %s436 = scalar_select %p435, %s27, 1
        %s437 = scalar_lea.vmem %s3, %s436
        %p438 = scmp.lt.s32.totalorder %s27, 1
        %s439 = scalar_select %p438, %s27, 1
        %s440 = scalar_lea.vmem %s4, %s439
        // Predicated region
        $region41: #{tpu_custom_call.1} parent=27 // pred_check
          %p441 = pneg %p109
        $region42: #{tpu_custom_call.1} parent=27 // pred_check_branch
          %443 = sbr.rel (%p441) target = $region44
        $region43: #{tpu_custom_call.1} parent=27 // pred_region
          _
        $region44: #{tpu_custom_call.1} parent=27 // pred_fallthru
          _
        // Predicated region
        $region45: #{tpu_custom_call.1} parent=27 // pred_check
          %p444 = pneg %p135
        $region46: #{tpu_custom_call.1} parent=27 // pred_check_branch
          %446 = sbr.rel (%p444) target = $region48
        $region47: #{tpu_custom_call.1} parent=27 // pred_region
          _
        $region48: #{tpu_custom_call.1} parent=27 // pred_fallthru
          _
      $region28: #{tpu_custom_call.1} parent=5 // pred_fallthru
        _
      %p447 = scmp.le.s32.totalorder 2, %s18
      // Predicated region
      $region49: #{tpu_custom_call.1} parent=5 // pred_check
        %p448 = pneg %p447
      $region50: #{tpu_custom_call.1} parent=5 // pred_check_branch
        %450 = sbr.rel (%p448) target = $region52
      $region51: #{tpu_custom_call.1} parent=5 // pred_region
        %s451 = ssub.s32 %s18, 2
        // Predicated region
        $region53: #{tpu_custom_call.1} parent=51 // pred_check
          %p452 = pneg %p115
        $region54: #{tpu_custom_call.1} parent=51 // pred_check_branch
          %454 = sbr.rel (%p452) target = $region56
        $region55: #{tpu_custom_call.1} parent=51 // pred_region
          %p455 = scmp.lt.s32.totalorder %s29, 1
          %s456 = scalar_select %p455, %s29, 1
          %s457 = scalar_lea.vmem %s3, %s456
        $region56: #{tpu_custom_call.1} parent=51 // pred_fallthru
          _
        // Predicated region
        $region57: #{tpu_custom_call.1} parent=51 // pred_check
          %p458 = pneg %p141
        $region58: #{tpu_custom_call.1} parent=51 // pred_check_branch
          %460 = sbr.rel (%p458) target = $region60
        $region59: #{tpu_custom_call.1} parent=51 // pred_region
          %p461 = scmp.lt.s32.totalorder %s29, 1
          %s462 = scalar_select %p461, %s29, 1
          %s463 = scalar_lea.vmem %s4, %s462
        $region60: #{tpu_custom_call.1} parent=51 // pred_fallthru
          _
      $region52: #{tpu_custom_call.1} parent=5 // pred_fallthru
        _
    $region6: #{tpu_custom_call.1} parent=1 // loop_footer
      %s22 = sadd.s32 1, %s18
    $region7: #{tpu_custom_call.1} parent=1 // loop_footer_branch
      %17 = sbr.rel target = $region3
    $region8: #{tpu_custom_call.1} parent=1 // loop_exit
      _
    %464 = vsyncpa [#allocation7], 1
    %s465 = scalar_lea.sflag [#allocation7], 1
    %466 = vsyncpa %s465, 1

</llo_original>
